<compile_context>
chip_gen: v5e
topology: v5e:2x2
jax: 0.10.0
libtpu: 0.0.40
codegen_flags: <defaults>
</compile_context>

<pallas_src>
import functools

import jax
import jax.numpy as jnp
from jax import lax
from jax.experimental import pallas as pl
from jax.experimental.pallas import tpu as pltpu

LN_EPS = 1e-5


def _vmem_config():
    """Generation-aware VMEM budget / megacore knobs."""
    kind = ""
    try:
        kind = jax.devices()[0].device_kind.lower()
    except Exception:
        pass
    if "v5" in kind or "v6" in kind:
        # 128 MiB physical VMEM, single TensorCore: favour the biggest block.
        return dict(budget=64 * 2**20, limit=96 * 2**20, two_cores=False)
    # v7x (64 MiB VMEM, 2 TensorCores) or unknown: stay conservative and keep
    # an even number of grid steps so both cores get equal work.
    return dict(budget=24 * 2**20, limit=48 * 2**20, two_cores=True)


def _choose_block_batch(B, C, HW, itemsize, Cv, budget, two_cores):
    """Largest Bt dividing B that fits the VMEM budget.  On 2-TC parts prefer
    Bt with an even grid-step count (odd counts idle one TensorCore)."""
    feasible = []
    for bt in range(1, B + 1):
        if B % bt:
            continue
        blocks = 2 * 2 * bt * C * HW * itemsize       # double-buffered in+out blocks
        temps = (Cv + 1 + 8) * HW * 4 + C * HW * 4    # one sample's f32 temps (vq/softmax/gate)
        if blocks + temps <= budget:
            feasible.append(bt)
    if not feasible:
        # TODO(synk): needs the spatial grid axis + online softmax for huge C*HW.
        return 1
    if two_cores and B > 1:
        even = [bt for bt in feasible if (B // bt) % 2 == 0]
        if even:
            return max(even)
    return max(feasible)


def psa_kernel(x_ref, wvq_ref, w1_ref, b1_ref, g_ref, beta_ref, w2_ref, b2_ref,
               o_ref, *, cv):
    Bt = x_ref.shape[0]

    # Tiny parameters, loaded once per grid step (hoisted out of the loop).
    wvq = wvq_ref[...]           # (Cv+1, C), io dtype
    w1 = w1_ref[...]             # (Cr, Cv)  f32
    b1 = b1_ref[...]             # (Cr, 1)   f32
    g = g_ref[...]               # (Cr, 1)   f32
    beta = beta_ref[...]         # (Cr, 1)   f32
    w2 = w2_ref[...]             # (C, Cr)   f32
    b2 = b2_ref[...]             # (C, 1)    f32

    def body(b, carry):
        xb = x_ref[b]                                                  # (C, HW)
        # conv_v_right + conv_q_right in one MXU matmul, f32 accumulation.
        vq = jnp.dot(wvq, xb, preferred_element_type=jnp.float32)     # (Cv+1, HW)
        v = vq[:cv]                                                    # (Cv, HW)
        q = vq[cv:cv + 1]                                              # (1, HW)
        # softmax over the spatial dim (dim=2 of the PyTorch (B,1,HW) view)
        q = q - jnp.max(q, axis=-1, keepdims=True)
        p = jnp.exp(q)
        attn = p * pl.reciprocal(jnp.sum(p, axis=-1, keepdims=True), approx=True)
        # context = matmul(input_x, softmax(mask)^T) on the MXU: (Cv, 1)
        ctx = lax.dot_general(v, attn,
                              dimension_numbers=(((1,), (1,)), ((), ())),
                              preferred_element_type=jnp.float32)
        # conv_up tail (all f32): 1x1 conv -> LayerNorm[Cr,1,1] -> ReLU -> 1x1 conv
        h = jnp.dot(w1, ctx, preferred_element_type=jnp.float32) + b1  # (Cr, 1)
        mu = jnp.mean(h, axis=0, keepdims=True)
        var = jnp.mean((h - mu) ** 2, axis=0, keepdims=True)
        h = (h - mu) * lax.rsqrt(var + LN_EPS) * g + beta
        h = jnp.maximum(h, 0.0)                                        # ReLU
        z = jnp.dot(w2, h, preferred_element_type=jnp.float32) + b2    # (C, 1)
        mask = jax.nn.sigmoid(z)                                       # (C, 1)
        # sigmoid gate, broadcast over the spatial (lane) dim; no relayout.
        o_ref[b] = (xb * mask.astype(xb.dtype)).astype(o_ref.dtype)
        return carry

    lax.fori_loop(0, Bt, body, 0)


def psa_s_pallas(x, wv, wq, w1, b1, gamma, beta, w2, b2, *,
                 out_dtype=None, block_batch=None):
    """x: (B, C, H, W) NCHW like the PyTorch module.  Output dtype defaults
    to x.dtype (no wrapper-side casts -> no extra HBM passes)."""
    B, C, H, W = x.shape
    HW = H * W
    Cv = wv.shape[0]
    Cr = w1.shape[0]
    out_dtype = out_dtype or x.dtype

    # Fold conv_q_right into conv_v_right: one (Cv+1, C) projection.
    # (Cv that is not a multiple of 8 still works, just costs a relayout
    #  when slicing the q row off the fused result.)
    wvq = jnp.concatenate([wv, wq.T], axis=0).astype(x.dtype)

    xf = x.reshape(B, C, HW)                 # free reshape, no pad, no cast

    f32 = lambda a: a.astype(jnp.float32)
    w1, b1, gamma, beta, w2, b2 = map(f32, (w1, b1, gamma, beta, w2, b2))

    cfg = _vmem_config()
    Bt = block_batch or _choose_block_batch(
        B, C, HW, jnp.dtype(x.dtype).itemsize, Cv,
        cfg["budget"], cfg["two_cores"])
    assert B % Bt == 0, "block_batch must divide the batch size"

    def full(shape):
        n = len(shape)
        return pl.BlockSpec(shape, lambda i, n=n: (0,) * n)

    out = pl.pallas_call(
        functools.partial(psa_kernel, cv=Cv),
        out_shape=jax.ShapeDtypeStruct((B, C, HW), out_dtype),
        grid_spec=pltpu.PrefetchScalarGridSpec(
            num_scalar_prefetch=0,
            grid=(B // Bt,),
            in_specs=[
                # full-extent last two dims -> exempt from (8,128) divisibility
                pl.BlockSpec((Bt, C, HW), lambda i: (i, 0, 0)),   # x
                full((Cv + 1, C)),   # fused conv_v_right / conv_q_right weight
                full((Cr, Cv)),      # conv_up[0].weight
                full((Cr, 1)),       # conv_up[0].bias
                full((Cr, 1)),       # LayerNorm gamma
                full((Cr, 1)),       # LayerNorm beta
                full((C, Cr)),       # conv_up[3].weight
                full((C, 1)),        # conv_up[3].bias
            ],
            out_specs=pl.BlockSpec((Bt, C, HW), lambda i: (i, 0, 0)),
        ),
        compiler_params=pltpu.CompilerParams(
            dimension_semantics=("parallel",),
            vmem_limit_bytes=cfg["limit"]),
    )(xf, wvq, w1, b1, gamma, beta, w2, b2)

    return out.reshape(B, C, H, W)


def psa_s_reference(x, wv, wq, w1, b1, gamma, beta, w2, b2):
    """Plain-JAX reference mirroring the PyTorch forward (f32)."""
    B, C, H, W = x.shape
    HW = H * W
    xf = x.reshape(B, C, HW)
    v = jnp.einsum('vc,bcs->bvs', wv, xf)
    q = jnp.einsum('c,bcs->bs', wq[:, 0], xf)
    attn = jax.nn.softmax(q, axis=-1)
    ctx = jnp.einsum('bvs,bs->bv', v, attn)
    h = ctx @ w1.T + b1[:, 0]
    mu = h.mean(-1, keepdims=True)
    var = ((h - mu) ** 2).mean(-1, keepdims=True)
    h = (h - mu) / jnp.sqrt(var + LN_EPS) * gamma[:, 0] + beta[:, 0]
    h = jnp.maximum(h, 0.0)
    z = h @ w2.T + b2[:, 0]
    mask = jax.nn.sigmoid(z)
    return x * mask[:, :, None, None]


if __name__ == "__main__":
    # inplanes == planes (required by the broadcast `x * mask_ch`),
    # inter_planes = planes // 2, ratio = 4.
    key = jax.random.PRNGKey(0)
    k = jax.random.split(key, 8)

    B, C, H, W = 2, 16, 16, 16
    Cv = C // 2            # inter_planes = 8
    Cr = Cv // 4           # inter_planes // ratio = 2

    x     = jax.random.normal(k[0], (B, C, H, W), dtype=jnp.float32)
    wv    = jax.random.normal(k[1], (Cv, C), dtype=jnp.float32) * 0.1   # conv_v_right
    wq    = jax.random.normal(k[2], (C, 1),  dtype=jnp.float32) * 0.1   # conv_q_right
    w1    = jax.random.normal(k[3], (Cr, Cv), dtype=jnp.float32) * 0.2  # conv_up[0].weight
    b1    = jax.random.normal(k[4], (Cr, 1), dtype=jnp.float32) * 0.1   # conv_up[0].bias
    gamma = jnp.ones((Cr, 1), dtype=jnp.float32)                        # LayerNorm weight
    beta  = jnp.zeros((Cr, 1), dtype=jnp.float32)                       # LayerNorm bias
    w2    = jax.random.normal(k[5], (C, Cr), dtype=jnp.float32) * 0.2   # conv_up[3].weight
    b2    = jax.random.normal(k[6], (C, 1), dtype=jnp.float32) * 0.1    # conv_up[3].bias
    weights = (wv, wq, w1, b1, gamma, beta, w2, b2)

    # 1) f32 I/O path (native dtype, no wrapper casts): matches the PyTorch
    #    forward; tolerance covers the EUP approximate softmax reciprocal.
    out32 = jax.block_until_ready(psa_s_pallas(x, *weights))
    ref32 = psa_s_reference(x, *weights)
    assert out32.shape == (B, C, H, W) and out32.dtype == jnp.float32
    assert jnp.allclose(out32, ref32, rtol=1e-2, atol=1e-2), "f32 mismatch vs reference"

    # 2) f32-in / bf16-out path (only the output store narrows; math is f32).
    out16 = jax.block_until_ready(psa_s_pallas(x, *weights, out_dtype=jnp.bfloat16))
    assert out16.dtype == jnp.bfloat16
    assert jnp.allclose(out16.astype(jnp.float32), ref32, rtol=5e-2, atol=5e-2), \
        "bf16-out mismatch vs reference"

    # 3) non-128-multiple spatial size (HW=144) + multi-sample block:
    #    exercises the unpadded full-extent last dim and the fori_loop body.
    B3, H3, W3 = 4, 12, 12
    x3 = jax.random.normal(k[7], (B3, C, H3, W3), dtype=jnp.float32)
    out3 = jax.block_until_ready(psa_s_pallas(x3, *weights))
    ref3 = psa_s_reference(x3, *weights)
    assert jnp.allclose(out3, ref3, rtol=1e-2, atol=1e-2), "unpadded-HW case mismatch"

    print("KERNEL_OK")
</pallas_src>

<mosaic_0001>
module attributes {stable_mosaic.version = 11 : i64} {
  func.func @psa_kernel(%arg0: i32, %arg1: memref<1x16x256xf32, #tpu.memory_space<vmem>>, %arg2: memref<9x16xf32, #tpu.memory_space<vmem>>, %arg3: memref<2x8xf32, #tpu.memory_space<vmem>>, %arg4: memref<2x1xf32, #tpu.memory_space<vmem>>, %arg5: memref<2x1xf32, #tpu.memory_space<vmem>>, %arg6: memref<2x1xf32, #tpu.memory_space<vmem>>, %arg7: memref<16x2xf32, #tpu.memory_space<vmem>>, %arg8: memref<16x1xf32, #tpu.memory_space<vmem>>, %arg9: memref<1x16x256xf32, #tpu.memory_space<vmem>>) attributes {dimension_semantics = [#tpu.dimension_semantics<parallel>], iteration_bounds = array<i64: 2>, scalar_prefetch = 0 : i64, scratch_operands = 0 : i64, tpu.core_type = #tpu.core_type<tc>, window_params = [{transform_indices = @transform_0, window_bounds = array<i64: 1, 16, 256>}, {pipeline_mode = #tpu.pipeline_mode<synchronous>, transform_indices = @transform_1, window_bounds = array<i64: 9, 16>}, {pipeline_mode = #tpu.pipeline_mode<synchronous>, transform_indices = @transform_2, window_bounds = array<i64: 2, 8>}, {pipeline_mode = #tpu.pipeline_mode<synchronous>, transform_indices = @transform_3, window_bounds = array<i64: 2, 1>}, {pipeline_mode = #tpu.pipeline_mode<synchronous>, transform_indices = @transform_4, window_bounds = array<i64: 2, 1>}, {pipeline_mode = #tpu.pipeline_mode<synchronous>, transform_indices = @transform_5, window_bounds = array<i64: 2, 1>}, {pipeline_mode = #tpu.pipeline_mode<synchronous>, transform_indices = @transform_6, window_bounds = array<i64: 16, 2>}, {pipeline_mode = #tpu.pipeline_mode<synchronous>, transform_indices = @transform_7, window_bounds = array<i64: 16, 1>}, {transform_indices = @transform_8, window_bounds = array<i64: 1, 16, 256>}]} {
    %c0 = arith.constant 0 : index
    %c0_0 = arith.constant 0 : index
    %0 = vector.load %arg2[%c0, %c0_0] : memref<9x16xf32, #tpu.memory_space<vmem>>, vector<9x16xf32>
    %c0_1 = arith.constant 0 : index
    %c0_2 = arith.constant 0 : index
    %1 = vector.load %arg3[%c0_1, %c0_2] : memref<2x8xf32, #tpu.memory_space<vmem>>, vector<2x8xf32>
    %c0_3 = arith.constant 0 : index
    %c0_4 = arith.constant 0 : index
    %2 = vector.load %arg4[%c0_3, %c0_4] : memref<2x1xf32, #tpu.memory_space<vmem>>, vector<2x1xf32>
    %c0_5 = arith.constant 0 : index
    %c0_6 = arith.constant 0 : index
    %3 = vector.load %arg5[%c0_5, %c0_6] : memref<2x1xf32, #tpu.memory_space<vmem>>, vector<2x1xf32>
    %c0_7 = arith.constant 0 : index
    %c0_8 = arith.constant 0 : index
    %4 = vector.load %arg6[%c0_7, %c0_8] : memref<2x1xf32, #tpu.memory_space<vmem>>, vector<2x1xf32>
    %c0_9 = arith.constant 0 : index
    %c0_10 = arith.constant 0 : index
    %5 = vector.load %arg7[%c0_9, %c0_10] : memref<16x2xf32, #tpu.memory_space<vmem>>, vector<16x2xf32>
    %c0_11 = arith.constant 0 : index
    %c0_12 = arith.constant 0 : index
    %6 = vector.load %arg8[%c0_11, %c0_12] : memref<16x1xf32, #tpu.memory_space<vmem>>, vector<16x1xf32>
    %c0_i32 = arith.constant 0 : i32
    %7 = arith.index_cast %c0_i32 : i32 to index
    %c0_13 = arith.constant 0 : index
    %c0_14 = arith.constant 0 : index
    %8 = vector.load %arg1[%7, %c0_13, %c0_14] : memref<1x16x256xf32, #tpu.memory_space<vmem>>, vector<1x16x256xf32>
    %9 = vector.shape_cast %8 : vector<1x16x256xf32> to vector<16x256xf32>
    %cst = arith.constant dense<0.000000e+00> : vector<9x256xf32>
    %10 = tpu.matmul %0, %9, %cst {dimension_numbers = #tpu.dot_dimension_numbers<[1], [0], [0], [1], [0, 0, 1, 1], [], []>} : vector<9x16xf32>, vector<16x256xf32>, vector<9x256xf32> -> vector<9x256xf32>
    %11 = vector.extract_strided_slice %10 {offsets = [0, 0], sizes = [8, 256], strides = [1, 1]} : vector<9x256xf32> to vector<8x256xf32>
    %12 = vector.extract_strided_slice %10 {offsets = [8, 0], sizes = [1, 256], strides = [1, 1]} : vector<9x256xf32> to vector<1x256xf32>
    %cst_15 = arith.constant dense<0xFF800000> : vector<1xf32>
    %13 = vector.multi_reduction <maximumf>, %12, %cst_15 [1] : vector<1x256xf32> to vector<1xf32>
    %14 = vector.shape_cast %13 : vector<1xf32> to vector<1x1xf32>
    %15 = vector.broadcast %14 : vector<1x1xf32> to vector<1x256xf32>
    %16 = arith.subf %12, %15 : vector<1x256xf32>
    %17 = math.exp %16 : vector<1x256xf32>
    %cst_16 = arith.constant dense<0.000000e+00> : vector<1xf32>
    %18 = vector.multi_reduction <add>, %17, %cst_16 [1] : vector<1x256xf32> to vector<1xf32>
    %19 = vector.shape_cast %18 : vector<1xf32> to vector<1x1xf32>
    %20 = tpu.reciprocal %19 {approx = true} : vector<1x1xf32> -> vector<1x1xf32>
    %21 = vector.broadcast %20 : vector<1x1xf32> to vector<1x256xf32>
    %22 = arith.mulf %17, %21 : vector<1x256xf32>
    %cst_17 = arith.constant dense<0.000000e+00> : vector<8x1xf32>
    %23 = tpu.matmul %11, %22, %cst_17 {dimension_numbers = #tpu.dot_dimension_numbers<[1], [1], [0], [0], [0, 0, 1, 0], [], []>} : vector<8x256xf32>, vector<1x256xf32>, vector<8x1xf32> -> vector<8x1xf32>
    %cst_18 = arith.constant dense<0.000000e+00> : vector<2x1xf32>
    %24 = tpu.matmul %1, %23, %cst_18 {dimension_numbers = #tpu.dot_dimension_numbers<[1], [0], [0], [1], [0, 0, 1, 1], [], []>} : vector<2x8xf32>, vector<8x1xf32>, vector<2x1xf32> -> vector<2x1xf32>
    %25 = arith.addf %24, %2 : vector<2x1xf32>
    %cst_19 = arith.constant dense<0.000000e+00> : vector<1xf32>
    %26 = vector.multi_reduction <add>, %25, %cst_19 [0] : vector<2x1xf32> to vector<1xf32>
    %27 = vector.shape_cast %26 : vector<1xf32> to vector<1x1xf32>
    %cst_20 = arith.constant 2.000000e+00 : f32
    %28 = vector.broadcast %cst_20 : f32 to vector<1x1xf32>
    %29 = arith.divf %27, %28 : vector<1x1xf32>
    %30 = vector.broadcast %29 : vector<1x1xf32> to vector<2x1xf32>
    %31 = arith.subf %25, %30 : vector<2x1xf32>
    %32 = arith.mulf %31, %31 : vector<2x1xf32>
    %cst_21 = arith.constant dense<0.000000e+00> : vector<1xf32>
    %33 = vector.multi_reduction <add>, %32, %cst_21 [0] : vector<2x1xf32> to vector<1xf32>
    %34 = vector.shape_cast %33 : vector<1xf32> to vector<1x1xf32>
    %cst_22 = arith.constant 2.000000e+00 : f32
    %35 = vector.broadcast %cst_22 : f32 to vector<1x1xf32>
    %36 = arith.divf %34, %35 : vector<1x1xf32>
    %37 = vector.broadcast %29 : vector<1x1xf32> to vector<2x1xf32>
    %38 = arith.subf %25, %37 : vector<2x1xf32>
    %cst_23 = arith.constant 9.99999974E-6 : f32
    %39 = vector.broadcast %cst_23 : f32 to vector<1x1xf32>
    %40 = arith.addf %36, %39 : vector<1x1xf32>
    %41 = math.rsqrt %40 : vector<1x1xf32>
    %42 = vector.broadcast %41 : vector<1x1xf32> to vector<2x1xf32>
    %43 = arith.mulf %38, %42 : vector<2x1xf32>
    %44 = arith.mulf %43, %3 : vector<2x1xf32>
    %45 = arith.addf %44, %4 : vector<2x1xf32>
    %cst_24 = arith.constant 0.000000e+00 : f32
    %46 = vector.broadcast %cst_24 : f32 to vector<2x1xf32>
    %47 = arith.maximumf %45, %46 : vector<2x1xf32>
    %cst_25 = arith.constant dense<0.000000e+00> : vector<16x1xf32>
    %48 = tpu.matmul %5, %47, %cst_25 {dimension_numbers = #tpu.dot_dimension_numbers<[1], [0], [0], [1], [0, 0, 1, 1], [], []>} : vector<16x2xf32>, vector<2x1xf32>, vector<16x1xf32> -> vector<16x1xf32>
    %49 = arith.addf %48, %6 : vector<16x1xf32>
    %50 = arith.negf %49 : vector<16x1xf32>
    %51 = math.exp %50 : vector<16x1xf32>
    %cst_26 = arith.constant 1.000000e+00 : f32
    %52 = vector.broadcast %cst_26 : f32 to vector<16x1xf32>
    %53 = arith.addf %52, %51 : vector<16x1xf32>
    %54 = arith.divf %52, %53 : vector<16x1xf32>
    %55 = vector.broadcast %54 : vector<16x1xf32> to vector<16x256xf32>
    %56 = arith.mulf %9, %55 : vector<16x256xf32>
    %57 = arith.index_cast %c0_i32 : i32 to index
    %c0_27 = arith.constant 0 : index
    %c0_28 = arith.constant 0 : index
    %58 = vector.load %arg9[%57, %c0_27, %c0_28] : memref<1x16x256xf32, #tpu.memory_space<vmem>>, vector<1x16x256xf32>
    %59 = vector.shape_cast %58 : vector<1x16x256xf32> to vector<16x256xf32>
    %60 = vector.shape_cast %56 : vector<16x256xf32> to vector<1x16x256xf32>
    tpu.vector_store %arg9[%57, %c0_27, %c0_28], %60 {strides = array<i32>} : memref<1x16x256xf32, #tpu.memory_space<vmem>>, vector<1x16x256xf32>,
    %c1_i32 = arith.constant 1 : i32
    return
  }
  func.func @transform_0(%arg0: i32) -> (i32, i32, i32) {
    %c0_i32 = arith.constant 0 : i32
    %c0_i32_0 = arith.constant 0 : i32
    %c0_i32_1 = arith.constant 0 : i32
    return %arg0, %c0_i32, %c0_i32_0 : i32, i32, i32
  }
  func.func @transform_1(%arg0: i32) -> (i32, i32) {
    %c0_i32 = arith.constant 0 : i32
    %c0_i32_0 = arith.constant 0 : i32
    %c0_i32_1 = arith.constant 0 : i32
    return %c0_i32, %c0_i32_0 : i32, i32
  }
  func.func @transform_2(%arg0: i32) -> (i32, i32) {
    %c0_i32 = arith.constant 0 : i32
    %c0_i32_0 = arith.constant 0 : i32
    %c0_i32_1 = arith.constant 0 : i32
    return %c0_i32, %c0_i32_0 : i32, i32
  }
  func.func @transform_3(%arg0: i32) -> (i32, i32) {
    %c0_i32 = arith.constant 0 : i32
    %c0_i32_0 = arith.constant 0 : i32
    %c0_i32_1 = arith.constant 0 : i32
    return %c0_i32, %c0_i32_0 : i32, i32
  }
  func.func @transform_4(%arg0: i32) -> (i32, i32) {
    %c0_i32 = arith.constant 0 : i32
    %c0_i32_0 = arith.constant 0 : i32
    %c0_i32_1 = arith.constant 0 : i32
    return %c0_i32, %c0_i32_0 : i32, i32
  }
  func.func @transform_5(%arg0: i32) -> (i32, i32) {
    %c0_i32 = arith.constant 0 : i32
    %c0_i32_0 = arith.constant 0 : i32
    %c0_i32_1 = arith.constant 0 : i32
    return %c0_i32, %c0_i32_0 : i32, i32
  }
  func.func @transform_6(%arg0: i32) -> (i32, i32) {
    %c0_i32 = arith.constant 0 : i32
    %c0_i32_0 = arith.constant 0 : i32
    %c0_i32_1 = arith.constant 0 : i32
    return %c0_i32, %c0_i32_0 : i32, i32
  }
  func.func @transform_7(%arg0: i32) -> (i32, i32) {
    %c0_i32 = arith.constant 0 : i32
    %c0_i32_0 = arith.constant 0 : i32
    %c0_i32_1 = arith.constant 0 : i32
    return %c0_i32, %c0_i32_0 : i32, i32
  }
  func.func @transform_8(%arg0: i32) -> (i32, i32, i32) {
    %c0_i32 = arith.constant 0 : i32
    %c0_i32_0 = arith.constant 0 : i32
    %c0_i32_1 = arith.constant 0 : i32
    return %arg0, %c0_i32, %c0_i32_0 : i32, i32, i32
  }
}

</mosaic_0001>

<llo_original>
// kernel: tpu_custom_call.1
$region0: #{tpu_custom_call.1}
  #allocation0 [shape = 'u32[]', space=smem, size = 0x4, offset = 0x4, fixed_abs, tag = 'smem constant byte address 0x4 - core index']
  #allocation1 [shape = 'u32[72,128]{1,0:T(1,128)}', space=vmem, size = 0x9000, scoped, tag = 'internal scratch']
  %s0 = inlined_call_operand.hbm [shape: f32[2,16,256], index: 0, kind: input, shape index: {}]
  %s1 = inlined_call_operand.vmem [shape: f32[9,16], index: 1, kind: input, shape index: {}]
  %s2 = inlined_call_operand.vmem [shape: f32[2,8], index: 2, kind: input, shape index: {}]
  %s3 = inlined_call_operand.vmem [shape: f32[2,1], index: 3, kind: input, shape index: {}]
  %s4 = inlined_call_operand.vmem [shape: f32[2,1], index: 4, kind: input, shape index: {}]
  %s5 = inlined_call_operand.vmem [shape: f32[2,1], index: 5, kind: input, shape index: {}]
  %s6 = inlined_call_operand.vmem [shape: f32[16,2], index: 6, kind: input, shape index: {}]
  %s7 = inlined_call_operand.vmem [shape: f32[16,1], index: 7, kind: input, shape index: {}]
  %s8 = inlined_call_operand.hbm [shape: f32[2,16,256], index: 8, kind: output, shape index: {}]
  %s9 = sld [smem:[#allocation0]]
  $region69: #{tpu_custom_call.1} parent=0
    _
  %s11 = ssub.s32 1, %s9
  %s12 = scalar_select 0, %s11, %s9
  $region1: #{tpu_custom_call.1} parent=0
    #allocation2 [shape = 'u8[32768]{0}', space=vmem, size = 0x8000, scoped, tag = 'input window, operand 0']
    #allocation3 [shape = 's32[2]{0}', space=sflag, size = 0x8, scoped, tag = 'scoped memory for tpu_custom_call.1']
    #allocation4 [shape = 's32[2]{0}', space=sflag, size = 0x8, scoped, tag = 'scoped memory for tpu_custom_call.1']
    #allocation5 [shape = 'u8[32768]{0}', space=vmem, size = 0x8000, scoped, tag = 'output window, operand 0']
    %13 = vsyncpa [#allocation3], 0
    %s14 = scalar_lea.sflag [#allocation3], 1
    %15 = vsyncpa %s14, 0
    %16 = vsyncpa [#allocation4], 0
    %s17 = scalar_lea.sflag [#allocation4], 1
    %18 = vsyncpa %s17, 0
    loop: start=0, step=1, limit=4
    $region2: #{tpu_custom_call.1} parent=1 // loop_pre_header
      _
    $region3: #{tpu_custom_call.1} parent=1 // loop_header
      %s20 = sphi 0, %s24
      %p21 = scmp.ge.s32.totalorder %s20, 4
      %s30 = sphi 0, %s32
      %s33 = sphi 0, %s30
      %s34 = sphi 0, %s33
      %s50 = sphi 0, %s34
      %s54 = sphi 0, %s54
      %s56 = sphi 0, %s54
      %s57 = sphi 0, %s56
      %s71 = sphi 0, %s57
      %s75 = sphi 0, %s75
      %s77 = sphi 0, %s75
      %s78 = sphi 0, %s77
      %s92 = sphi 0, %s78
      %s96 = sphi 0, %s96
      %s98 = sphi 0, %s96
      %s99 = sphi 0, %s98
      %s113 = sphi 0, %s99
      %s117 = sphi 0, %s117
      %s119 = sphi 0, %s117
      %s120 = sphi 0, %s119
      %s134 = sphi 0, %s120
      %s138 = sphi 0, %s138
      %s140 = sphi 0, %s138
      %s141 = sphi 0, %s140
      %s155 = sphi 0, %s141
      %s159 = sphi 0, %s159
      %s161 = sphi 0, %s159
      %s162 = sphi 0, %s161
      %s176 = sphi 0, %s162
      %s180 = sphi 0, %s180
      %s182 = sphi 0, %s180
      %s183 = sphi 0, %s182
      %s197 = sphi 0, %s183
      %s203 = sphi 0, %s205
      %s206 = sphi 0, %s203
      %s207 = sphi 0, %s206
      %s223 = sphi 0, %s207
    $region4: #{tpu_custom_call.1} parent=1 // loop_header_branch
      %23 = sbr.rel (%p21) target = $region8
    $region5: #{tpu_custom_call.1} parent=1 // loop_body
      %s25 = ssub.s32 %s20, 1
      %s26 = ssub.s32 %s20, 2
      %s27 = sadd.s32 %s20, 1
      %s28 = ssub.s32 %s20, %s27
      %p29 = scmp.eq.s32.totalorder %s28, 0
      %s31 = sadd.s32 %s30, 1
      %s32 = scalar_select %p29, %s30, %s31
      %p35 = pneg %p29
      %p36 = scmp.eq.s32.totalorder %s20, 1
      %p37 = por %p35, %p36
      %p38 = scmp.ne.s32.totalorder %s30, %s33
      %p39 = scmp.eq.s32.totalorder %s20, 0
      %p40 = por %p38, %p39
      %p41 = scmp.ne.s32.totalorder %s30, %s33
      %p42 = scmp.eq.s32.totalorder %s25, 1
      %p43 = por %p41, %p42
      %p44 = scmp.ne.s32.totalorder %s33, %s34
      %p45 = scmp.eq.s32.totalorder %s25, 0
      %p46 = por %p44, %p45
      %p47 = scmp.ne.s32.totalorder %s33, %s34
      %p48 = scmp.eq.s32.totalorder %s26, 1
      %p49 = por %p47, %p48
      %p51 = scmp.ne.s32.totalorder %s34, %s50
      %p52 = scmp.eq.s32.totalorder %s26, 0
      %p53 = por %p51, %p52
      %s55 = sadd.s32 %s54, 1
      %p58 = scmp.eq.s32.totalorder %s20, 1
      %p59 = scmp.ne.s32.totalorder %s54, %s56
      %p60 = scmp.eq.s32.totalorder %s20, 0
      %p61 = por %p59, %p60
      %p62 = scmp.ne.s32.totalorder %s54, %s56
      %p63 = scmp.eq.s32.totalorder %s25, 1
      %p64 = por %p62, %p63
      %p65 = scmp.ne.s32.totalorder %s56, %s57
      %p66 = scmp.eq.s32.totalorder %s25, 0
      %p67 = por %p65, %p66
      %p68 = scmp.ne.s32.totalorder %s56, %s57
      %p69 = scmp.eq.s32.totalorder %s26, 1
      %p70 = por %p68, %p69
      %p72 = scmp.ne.s32.totalorder %s57, %s71
      %p73 = scmp.eq.s32.totalorder %s26, 0
      %p74 = por %p72, %p73
      %s76 = sadd.s32 %s75, 1
      %p79 = scmp.eq.s32.totalorder %s20, 1
      %p80 = scmp.ne.s32.totalorder %s75, %s77
      %p81 = scmp.eq.s32.totalorder %s20, 0
      %p82 = por %p80, %p81
      %p83 = scmp.ne.s32.totalorder %s75, %s77
      %p84 = scmp.eq.s32.totalorder %s25, 1
      %p85 = por %p83, %p84
      %p86 = scmp.ne.s32.totalorder %s77, %s78
      %p87 = scmp.eq.s32.totalorder %s25, 0
      %p88 = por %p86, %p87
      %p89 = scmp.ne.s32.totalorder %s77, %s78
      %p90 = scmp.eq.s32.totalorder %s26, 1
      %p91 = por %p89, %p90
      %p93 = scmp.ne.s32.totalorder %s78, %s92
      %p94 = scmp.eq.s32.totalorder %s26, 0
      %p95 = por %p93, %p94
      %s97 = sadd.s32 %s96, 1
      %p100 = scmp.eq.s32.totalorder %s20, 1
      %p101 = scmp.ne.s32.totalorder %s96, %s98
      %p102 = scmp.eq.s32.totalorder %s20, 0
      %p103 = por %p101, %p102
      %p104 = scmp.ne.s32.totalorder %s96, %s98
      %p105 = scmp.eq.s32.totalorder %s25, 1
      %p106 = por %p104, %p105
      %p107 = scmp.ne.s32.totalorder %s98, %s99
      %p108 = scmp.eq.s32.totalorder %s25, 0
      %p109 = por %p107, %p108
      %p110 = scmp.ne.s32.totalorder %s98, %s99
      %p111 = scmp.eq.s32.totalorder %s26, 1
      %p112 = por %p110, %p111
      %p114 = scmp.ne.s32.totalorder %s99, %s113
      %p115 = scmp.eq.s32.totalorder %s26, 0
      %p116 = por %p114, %p115
      %s118 = sadd.s32 %s117, 1
      %p121 = scmp.eq.s32.totalorder %s20, 1
      %p122 = scmp.ne.s32.totalorder %s117, %s119
      %p123 = scmp.eq.s32.totalorder %s20, 0
      %p124 = por %p122, %p123
      %p125 = scmp.ne.s32.totalorder %s117, %s119
      %p126 = scmp.eq.s32.totalorder %s25, 1
      %p127 = por %p125, %p126
      %p128 = scmp.ne.s32.totalorder %s119, %s120
      %p129 = scmp.eq.s32.totalorder %s25, 0
      %p130 = por %p128, %p129
      %p131 = scmp.ne.s32.totalorder %s119, %s120
      %p132 = scmp.eq.s32.totalorder %s26, 1
      %p133 = por %p131, %p132
      %p135 = scmp.ne.s32.totalorder %s120, %s134
      %p136 = scmp.eq.s32.totalorder %s26, 0
      %p137 = por %p135, %p136
      %s139 = sadd.s32 %s138, 1
      %p142 = scmp.eq.s32.totalorder %s20, 1
      %p143 = scmp.ne.s32.totalorder %s138, %s140
      %p144 = scmp.eq.s32.totalorder %s20, 0
      %p145 = por %p143, %p144
      %p146 = scmp.ne.s32.totalorder %s138, %s140
      %p147 = scmp.eq.s32.totalorder %s25, 1
      %p148 = por %p146, %p147
      %p149 = scmp.ne.s32.totalorder %s140, %s141
      %p150 = scmp.eq.s32.totalorder %s25, 0
      %p151 = por %p149, %p150
      %p152 = scmp.ne.s32.totalorder %s140, %s141
      %p153 = scmp.eq.s32.totalorder %s26, 1
      %p154 = por %p152, %p153
      %p156 = scmp.ne.s32.totalorder %s141, %s155
      %p157 = scmp.eq.s32.totalorder %s26, 0
      %p158 = por %p156, %p157
      %s160 = sadd.s32 %s159, 1
      %p163 = scmp.eq.s32.totalorder %s20, 1
      %p164 = scmp.ne.s32.totalorder %s159, %s161
      %p165 = scmp.eq.s32.totalorder %s20, 0
      %p166 = por %p164, %p165
      %p167 = scmp.ne.s32.totalorder %s159, %s161
      %p168 = scmp.eq.s32.totalorder %s25, 1
      %p169 = por %p167, %p168
      %p170 = scmp.ne.s32.totalorder %s161, %s162
      %p171 = scmp.eq.s32.totalorder %s25, 0
      %p172 = por %p170, %p171
      %p173 = scmp.ne.s32.totalorder %s161, %s162
      %p174 = scmp.eq.s32.totalorder %s26, 1
      %p175 = por %p173, %p174
      %p177 = scmp.ne.s32.totalorder %s162, %s176
      %p178 = scmp.eq.s32.totalorder %s26, 0
      %p179 = por %p177, %p178
      %s181 = sadd.s32 %s180, 1
      %p184 = scmp.eq.s32.totalorder %s20, 1
      %p185 = scmp.ne.s32.totalorder %s180, %s182
      %p186 = scmp.eq.s32.totalorder %s20, 0
      %p187 = por %p185, %p186
      %p188 = scmp.ne.s32.totalorder %s180, %s182
      %p189 = scmp.eq.s32.totalorder %s25, 1
      %p190 = por %p188, %p189
      %p191 = scmp.ne.s32.totalorder %s182, %s183
      %p192 = scmp.eq.s32.totalorder %s25, 0
      %p193 = por %p191, %p192
      %p194 = scmp.ne.s32.totalorder %s182, %s183
      %p195 = scmp.eq.s32.totalorder %s26, 1
      %p196 = por %p194, %p195
      %p198 = scmp.ne.s32.totalorder %s183, %s197
      %p199 = scmp.eq.s32.totalorder %s26, 0
      %p200 = por %p198, %p199
      %s201 = ssub.s32 %s20, %s27
      %p202 = scmp.eq.s32.totalorder %s201, 0
      %s204 = sadd.s32 %s203, 1
      %s205 = scalar_select %p202, %s203, %s204
      %p208 = pneg %p202
      %p209 = scmp.eq.s32.totalorder %s20, 1
      %p210 = por %p208, %p209
      %p211 = scmp.ne.s32.totalorder %s203, %s206
      %p212 = scmp.eq.s32.totalorder %s20, 0
      %p213 = por %p211, %p212
      %p214 = scmp.ne.s32.totalorder %s203, %s206
      %p215 = scmp.eq.s32.totalorder %s25, 1
      %p216 = por %p214, %p215
      %p217 = scmp.ne.s32.totalorder %s206, %s207
      %p218 = scmp.eq.s32.totalorder %s25, 0
      %p219 = por %p217, %p218
      %p220 = scmp.ne.s32.totalorder %s206, %s207
      %p221 = scmp.eq.s32.totalorder %s26, 1
      %p222 = por %p220, %p221
      %p224 = scmp.ne.s32.totalorder %s207, %s223
      %p225 = scmp.eq.s32.totalorder %s26, 0
      %p226 = por %p224, %p225
      %p227 = scmp.le.s32.totalorder 1, %s20
      %p228 = scmp.lt.s32.totalorder %s20, 3
      %p229 = pnand %p227, %p228
      %p230 = pneg %p229
      // Predicated region
      $region9: #{tpu_custom_call.1} parent=5 // pred_check
        _
      $region10: #{tpu_custom_call.1} parent=5 // pred_check_branch
        %232 = sbr.rel (%p229) target = $region12
      $region11: #{tpu_custom_call.1} parent=5 // pred_region
        %s233 = ssub.s32 %s20, 1
        // Predicated region
        $region13: #{tpu_custom_call.1} parent=11 // pred_check
          %p234 = pneg %p67
        $region14: #{tpu_custom_call.1} parent=11 // pred_check_branch
          %236 = sbr.rel (%p234) target = $region16
        $region15: #{tpu_custom_call.1} parent=11 // pred_region
          _
        $region16: #{tpu_custom_call.1} parent=11 // pred_fallthru
          _
        // Predicated region
        $region17: #{tpu_custom_call.1} parent=11 // pred_check
          %p237 = pneg %p88
        $region18: #{tpu_custom_call.1} parent=11 // pred_check_branch
          %239 = sbr.rel (%p237) target = $region20
        $region19: #{tpu_custom_call.1} parent=11 // pred_region
          _
        $region20: #{tpu_custom_call.1} parent=11 // pred_fallthru
          _
        // Predicated region
        $region21: #{tpu_custom_call.1} parent=11 // pred_check
          %p240 = pneg %p109
        $region22: #{tpu_custom_call.1} parent=11 // pred_check_branch
          %242 = sbr.rel (%p240) target = $region24
        $region23: #{tpu_custom_call.1} parent=11 // pred_region
          _
        $region24: #{tpu_custom_call.1} parent=11 // pred_fallthru
          _
        // Predicated region
        $region25: #{tpu_custom_call.1} parent=11 // pred_check
          %p243 = pneg %p130
        $region26: #{tpu_custom_call.1} parent=11 // pred_check_branch
          %245 = sbr.rel (%p243) target = $region28
        $region27: #{tpu_custom_call.1} parent=11 // pred_region
          _
        $region28: #{tpu_custom_call.1} parent=11 // pred_fallthru
          _
        // Predicated region
        $region29: #{tpu_custom_call.1} parent=11 // pred_check
          %p246 = pneg %p151
        $region30: #{tpu_custom_call.1} parent=11 // pred_check_branch
          %248 = sbr.rel (%p246) target = $region32
        $region31: #{tpu_custom_call.1} parent=11 // pred_region
          _
        $region32: #{tpu_custom_call.1} parent=11 // pred_fallthru
          _
        // Predicated region
        $region33: #{tpu_custom_call.1} parent=11 // pred_check
          %p249 = pneg %p172
        $region34: #{tpu_custom_call.1} parent=11 // pred_check_branch
          %251 = sbr.rel (%p249) target = $region36
        $region35: #{tpu_custom_call.1} parent=11 // pred_region
          _
        $region36: #{tpu_custom_call.1} parent=11 // pred_fallthru
          _
        // Predicated region
        $region37: #{tpu_custom_call.1} parent=11 // pred_check
          %p252 = pneg %p193
        $region38: #{tpu_custom_call.1} parent=11 // pred_check_branch
          %254 = sbr.rel (%p252) target = $region40
        $region39: #{tpu_custom_call.1} parent=11 // pred_region
          _
        $region40: #{tpu_custom_call.1} parent=11 // pred_fallthru
          _
      $region12: #{tpu_custom_call.1} parent=5 // pred_fallthru
        _
      %p255 = scmp.lt.s32.totalorder %s20, 2
      // Predicated region
      $region41: #{tpu_custom_call.1} parent=5 // pred_check
        %p256 = pneg %p255
      $region42: #{tpu_custom_call.1} parent=5 // pred_check_branch
        %258 = sbr.rel (%p256) target = $region44
      $region43: #{tpu_custom_call.1} parent=5 // pred_region
        // Predicated region
        $region45: #{tpu_custom_call.1} parent=43 // pred_check
          %p259 = pneg %p40
        $region46: #{tpu_custom_call.1} parent=43 // pred_check_branch
          %261 = sbr.rel (%p259) target = $region48
        $region47: #{tpu_custom_call.1} parent=43 // pred_region
          %s262 = sand.u32 %s30, 1
          %s263 = scalar_lea.sflag [#allocation3], %s262
          %s264 = sand.u32 %s30, 1
          %s265 = smul.addr %s264, 32
          %s266 = scalar_lea.vmem [#allocation2], %s265
          %268 = vsyncadd %s263, 0
          %s269 = smul.addr %s20, 4
          %s270 = smul.addr %s269, 8
          %s271 = scalar_lea.hbm %s0, %s270
          %s272 = sshll.u32 %s271, 4
          %s273 = int_to_ptr.hbm [resolvable:$true] %s272
          %s274 = sshll.u32 %s266, 4
          %s275 = int_to_ptr.vmem [resolvable:$true] %s274
          %280 = dma.hbm_to_vmem [thread:$0]  %s273, 512, %s275, %s263, 256, 256, 16
        $region48: #{tpu_custom_call.1} parent=43 // pred_fallthru
          _
      $region44: #{tpu_custom_call.1} parent=5 // pred_fallthru
        _
      %p281 = scmp.le.s32.totalorder 1, %s20
      %p282 = scmp.lt.s32.totalorder %s20, 3
      %p283 = pnand %p281, %p282
      %p284 = pneg %p283
      // Predicated region
      $region49: #{tpu_custom_call.1} parent=5 // pred_check
        _
      $region50: #{tpu_custom_call.1} parent=5 // pred_check_branch
        %286 = sbr.rel (%p283) target = $region52
      $region51: #{tpu_custom_call.1} parent=5 // pred_region
        %s287 = ssub.s32 %s20, 1
        %s288 = sand.u32 %s33, 1
        %s289 = scalar_lea.sflag [#allocation3], %s288
        %s290 = sand.u32 %s33, 1
        %s291 = smul.addr %s290, 32
        %s292 = scalar_lea.vmem [#allocation2], %s291
        // Predicated region
        $region53: #{tpu_custom_call.1} parent=51 // pred_check
          %p293 = pneg %p46
        $region54: #{tpu_custom_call.1} parent=51 // pred_check_branch
          %295 = sbr.rel (%p293) target = $region56
        $region55: #{tpu_custom_call.1} parent=51 // pred_region
          %297 = dma.done %s289, 512
        $region56: #{tpu_custom_call.1} parent=51 // pred_fallthru
          _
        %s298 = sand.u32 %s33, 1
        %s299 = scalar_lea.sflag [#allocation3], %s298
        %s300 = sand.u32 %s33, 1
        %s301 = smul.addr %s300, 32
        %s302 = scalar_lea.vmem [#allocation2], %s301
        %p303 = pneg %p46
        %p304 = pneg %p43
        %p305 = pneg %p67
        %p306 = pneg %p64
        %p307 = pneg %p88
        %p308 = pneg %p85
        %p309 = pneg %p109
        %p310 = pneg %p106
        %p311 = pneg %p130
        %p312 = pneg %p127
        %p313 = pneg %p151
        %p314 = pneg %p148
        %p315 = pneg %p172
        %p316 = pneg %p169
        %p317 = pneg %p193
        %p318 = pneg %p190
        %p319 = pneg %p219
        %p320 = pneg %p216
        %s321 = sand.u32 %s206, 1
        %s322 = scalar_lea.sflag [#allocation4], %s321
        %s323 = sand.u32 %s206, 1
        %s324 = smul.addr %s323, 32
        %s325 = scalar_lea.vmem [#allocation5], %s324
        %v326 = vld [vmem:[%s1] sm:$0xff]
        %v327 = vld [vmem:[%s1 + $0x8] sm:$0x1]
        %v328 = vld [vmem:[%s2] sm:$0x3]
        %v329 = vld [vmem:[%s3] sm:$0x3]
        %v330 = vld [vmem:[%s4] sm:$0x3]
        %v331 = vld [vmem:[%s5] sm:$0x3]
        %v332 = vld [vmem:[%s6] sm:$0xff]
        %v333 = vld [vmem:[%s6 + $0x8] sm:$0xff]
        %v334 = vld [vmem:[%s7] sm:$0xff]
        %v335 = vld [vmem:[%s7 + $0x8] sm:$0xff]
        %v336 = vld [vmem:[%s292] sm:$0xff]
        %v337 = vld [vmem:[%s292 + $0x8] sm:$0xff]
        %v338 = vld [vmem:[%s292 + $0x10] sm:$0xff]
        %v339 = vld [vmem:[%s292 + $0x18] sm:$0xff]
        %vm340 = vcmask 130048
        %v342 = vsel %vm340, %v326, 0
        %v345 = vsel %vm340, %v327, 0
        %347 = vmatpush.msra.mxu0 0.0
        %348 = vmatpush.msra.mxu0 0.0
        %349 = vmatpush.msra.mxu0 0.0
        %350 = vmatpush.msra.mxu0 0.0
        %351 = vmatpush.msra.mxu0 0.0
        %352 = vmatpush.msra.mxu0 0.0
        %353 = vmatpush.msra.mxu0 0.0
        %354 = vmatpush.msra.mxu0 0.0
        %355 = vmatpush.msra.mxu0 0.0
        %356 = vmatpush.msra.mxu0 0.0
        %357 = vmatpush.msra.mxu0 0.0
        %358 = vmatpush.msra.mxu0 0.0
        %359 = vmatpush.msra.mxu0 0.0
        %360 = vmatpush.msra.mxu0 0.0
        %361 = vmatpush.msra.mxu0 %v338
        %362 = vmatpush.msra.mxu0 %v336
        %363 = vmatmul.f32.gmra.mxu0 %v342
        %v364 = vpop.f32.mrf.mxu0
        %v365 = vadd.f32 0.0, %v364
        %366 = vmatmul.f32.gmra.mxu0 %v345
        %v367 = vpop.f32.mrf.mxu0
        %v368 = vadd.f32 0.0, %v367
        %369 = vdwg.mxu0
        %370 = vmatpush.msra.mxu0 0.0
        %371 = vmatpush.msra.mxu0 0.0
        %372 = vmatpush.msra.mxu0 0.0
        %373 = vmatpush.msra.mxu0 0.0
        %374 = vmatpush.msra.mxu0 0.0
        %375 = vmatpush.msra.mxu0 0.0
        %376 = vmatpush.msra.mxu0 0.0
        %377 = vmatpush.msra.mxu0 0.0
        %378 = vmatpush.msra.mxu0 0.0
        %379 = vmatpush.msra.mxu0 0.0
        %380 = vmatpush.msra.mxu0 0.0
        %381 = vmatpush.msra.mxu0 0.0
        %382 = vmatpush.msra.mxu0 0.0
        %383 = vmatpush.msra.mxu0 0.0
        %384 = vmatpush.msra.mxu0 %v339
        %385 = vmatpush.msra.mxu0 %v337
        %386 = vmatmul.f32.gmra.mxu0 %v342
        %v387 = vpop.f32.mrf.mxu0
        %v388 = vadd.f32 0.0, %v387
        %389 = vmatmul.f32.gmra.mxu0 %v345
        %v390 = vpop.f32.mrf.mxu0
        %v391 = vadd.f32 0.0, %v390
        %392 = vdwg.mxu0
        %vm393 = vcmask 1040384
        %v394 = vsel %vm393, %v368, -inf
        %v395 = vsel %vm393, %v391, -inf
        %v396 = vmax.f32 %v394, %v395
        %397 = vmax.xlane.f32.xlu0 %v396
        %v398 = vpop.xlane.xlu0 %397
        %v399 = vsub.f32 %v368, %v398
        %v400 = vsub.f32 %v391, %v398
        %v401 = vmul.f32 %v399, 1.442695
        %v402 = vpow.pop %v401
        %v403 = vmul.f32 %v400, 1.442695
        %v404 = vpow.pop %v403
        %v405 = vsel %vm393, %v402, 0.0
        %v406 = vsel %vm393, %v404, 0.0
        %v407 = vadd.f32 %v405, %v406
        %408 = vadd.xlane.f32.xlu0 %v407
        %v409 = vpop.xlane.xlu0 %408
        %v410 = vrcp.pop %v409
        %v411 = vmul.f32 %v402, %v410
        %v412 = vmul.f32 %v404, %v410
        %v413 = vperm.slane %v411, 0
        %v414 = vperm.slane %v412, 0
        %v415 = vmul.f32 %v365, %v413
        %v416 = vmul.f32 %v388, %v414
        %v417 = vadd.f32 %v415, %v416
        %418 = vadd.xlane.f32.xlu0 %v417
        %v419 = vpop.xlane.xlu0 %418
        %vm420 = vcmask 64512
        %v422 = vsel %vm420, %v328, 0
        %424 = vmatpush.msra.mxu0 0.0
        %425 = vmatpush.msra.mxu0 0.0
        %426 = vmatpush.msra.mxu0 0.0
        %427 = vmatpush.msra.mxu0 0.0
        %428 = vmatpush.msra.mxu0 0.0
        %429 = vmatpush.msra.mxu0 0.0
        %430 = vmatpush.msra.mxu0 0.0
        %431 = vmatpush.msra.mxu0 0.0
        %432 = vmatpush.msra.mxu0 0.0
        %433 = vmatpush.msra.mxu0 0.0
        %434 = vmatpush.msra.mxu0 0.0
        %435 = vmatpush.msra.mxu0 0.0
        %436 = vmatpush.msra.mxu0 0.0
        %437 = vmatpush.msra.mxu0 0.0
        %438 = vmatpush.msra.mxu0 0.0
        %439 = vmatpush.msra.mxu0 %v419
        %440 = vmatmul.f32.gmra.mxu0 %v422
        %v441 = vpop.f32.mrf.mxu0
        %v442 = vadd.f32 %v329, %v441
        %443 = vdwg.mxu0
        %vm444 = vcmask 1024
        %v445 = vsel %vm444, %v442, 0.0
        %v446 = vrot.slane %v445, 4
        %v447 = vadd.f32 %v445, %v446
        %v448 = vrot.slane %v447, 2
        %v449 = vadd.f32 %v447, %v448
        %v450 = vrot.slane %v449, 1
        %v451 = vadd.f32 %v449, %v450
        %v452 = vrcp.pop 2.0
        %v453 = vmul.f32 2.0, %v452
        %v454 = vsub.f32 1.0, %v453
        %v455 = vmul.f32 %v452, %v454
        %v456 = vadd.f32 %v452, %v455
        %vm457 = vweird.f32 %v452
        %v458 = vsel %vm457, %v452, %v456
        %v459 = vmul.f32 %v451, %v458
        %v460 = vsub.f32 %v442, %v459
        %v461 = vmul.f32 %v460, %v460
        %v462 = vsel %vm444, %v461, 0.0
        %v463 = vrot.slane %v462, 4
        %v464 = vadd.f32 %v462, %v463
        %v465 = vrot.slane %v464, 2
        %v466 = vadd.f32 %v464, %v465
        %v467 = vrot.slane %v466, 1
        %v468 = vadd.f32 %v466, %v467
        %v469 = vmul.f32 %v468, %v458
        %v470 = vadd.f32 %v469, 1e-05
        %v471 = vrsqrt.pop %v470
        %v472 = vmul.f32 %v471, %v470
        %v473 = vmul.f32 %v472, %v471
        %v474 = vmul.f32 0.5, %v473
        %v475 = vsub.f32 1.5, %v474
        %v476 = vmul.f32 %v471, %v475
        %vm477 = vweird.f32 %v470
        %vm478 = vweird.f32 %v471
        %vm479 = vmor %vm477, %vm478
        %v480 = vsel %vm479, %v471, %v476
        %v481 = vmul.f32 %v460, %v480
        %v482 = vmul.f32 %v481, %v330
        %v483 = vadd.f32 %v482, %v331
        %v484 = vmax.f32 %v483, 0.0
        %vm485 = vcmask 15360
        %v487 = vsel %vm485, %v332, 0
        %v490 = vsel %vm485, %v333, 0
        %vm492 = vcmask 1041408
        %v494 = vsel %vm492, %v484, 0
        %496 = vmatpush.msra.mxu0 0.0
        %497 = vmatpush.msra.mxu0 0.0
        %498 = vmatpush.msra.mxu0 0.0
        %499 = vmatpush.msra.mxu0 0.0
        %500 = vmatpush.msra.mxu0 0.0
        %501 = vmatpush.msra.mxu0 0.0
        %502 = vmatpush.msra.mxu0 0.0
        %503 = vmatpush.msra.mxu0 0.0
        %504 = vmatpush.msra.mxu0 0.0
        %505 = vmatpush.msra.mxu0 0.0
        %506 = vmatpush.msra.mxu0 0.0
        %507 = vmatpush.msra.mxu0 0.0
        %508 = vmatpush.msra.mxu0 0.0
        %509 = vmatpush.msra.mxu0 0.0
        %510 = vmatpush.msra.mxu0 0.0
        %511 = vmatpush.msra.mxu0 %v494
        %512 = vmatmul.f32.gmra.mxu0 %v487
        %v513 = vpop.f32.mrf.mxu0
        %v514 = vadd.f32 %v334, %v513
        %515 = vmatmul.f32.gmra.mxu0 %v490
        %v516 = vpop.f32.mrf.mxu0
        %v517 = vadd.f32 %v335, %v516
        %518 = vdwg.mxu0
        %v519 = vxor.u32 %v514, 2147483648
        %v520 = vxor.u32 %v517, 2147483648
        %v521 = vmul.f32 %v519, 1.442695
        %v522 = vpow.pop %v521
        %v523 = vmul.f32 %v520, 1.442695
        %v524 = vpow.pop %v523
        %v525 = vadd.f32 %v522, 1.0
        %v526 = vadd.f32 %v524, 1.0
        %v527 = vrcp.pop %v525
        %v528 = vmul.f32 %v525, %v527
        %v529 = vsub.f32 1.0, %v528
        %v530 = vmul.f32 %v527, %v529
        %v531 = vadd.f32 %v527, %v530
        %vm532 = vweird.f32 %v525
        %vm533 = vweird.f32 %v527
        %vm534 = vmor %vm532, %vm533
        %v535 = vsel %vm534, %v527, %v531
        %v536 = vand.u32 2147483647, %v525
        %vm537 = vcmp.eq.f32.partialorder %v536, 8.507059e+37
        %v538 = vand.u32 %v525, 2147483648
        %v539 = vor.u32 1.1754944e-38, %v538
        %v540 = vsel %vm537, %v539, %v535
        %v541 = vmul.f32 1.0, %v540
        %v542 = vrcp.pop %v526
        %v543 = vmul.f32 %v526, %v542
        %v544 = vsub.f32 1.0, %v543
        %v545 = vmul.f32 %v542, %v544
        %v546 = vadd.f32 %v542, %v545
        %vm547 = vweird.f32 %v526
        %vm548 = vweird.f32 %v542
        %vm549 = vmor %vm547, %vm548
        %v550 = vsel %vm549, %v542, %v546
        %v551 = vand.u32 2147483647, %v526
        %vm552 = vcmp.eq.f32.partialorder %v551, 8.507059e+37
        %v553 = vand.u32 %v526, 2147483648
        %v554 = vor.u32 1.1754944e-38, %v553
        %v555 = vsel %vm552, %v554, %v550
        %v556 = vmul.f32 1.0, %v555
        %558 = vset.pattern.permute.xlu0 0
        %559 = vperm.xlu0 %558, %v541
        %v560 = vpop.permute.xlu0 %559
        %563 = vset.pattern.permute.xlu0 0
        %564 = vperm.xlu0 %563, %v556
        %v565 = vpop.permute.xlu0 %564
        %v567 = vmul.f32 %v336, %v560
        %v568 = vmul.f32 %v337, %v560
        %v569 = vmul.f32 %v338, %v565
        %v570 = vmul.f32 %v339, %v565
        %571 = vst [vmem:[%s325] sm:$0xff] %v567
        %572 = vst [vmem:[%s325 + $0x8] sm:$0xff] %v568
        %573 = vst [vmem:[%s325 + $0x10] sm:$0xff] %v569
        %574 = vst [vmem:[%s325 + $0x18] sm:$0xff] %v570
        %s575 = sand.u32 %s206, 1
        %s576 = scalar_lea.sflag [#allocation4], %s575
        %s577 = sand.u32 %s206, 1
        %s578 = smul.addr %s577, 32
        %s579 = scalar_lea.vmem [#allocation5], %s578
        // Predicated region
        $region57: #{tpu_custom_call.1} parent=51 // pred_check
          %p580 = pneg %p216
        $region58: #{tpu_custom_call.1} parent=51 // pred_check_branch
          %582 = sbr.rel (%p580) target = $region60
        $region59: #{tpu_custom_call.1} parent=51 // pred_region
          %584 = vsyncadd %s576, 0
          %s585 = smul.addr %s25, 4
          %s586 = smul.addr %s585, 8
          %s587 = scalar_lea.hbm %s8, %s586
          %s588 = sshll.u32 %s579, 4
          %s589 = int_to_ptr.vmem [resolvable:$true] %s588
          %s590 = sshll.u32 %s587, 4
          %s591 = int_to_ptr.hbm [resolvable:$true] %s590
          %596 = dma.vmem_to_hbm [thread:$0]  %s589, 512, %s591, %s576, 256, 256, 16
        $region60: #{tpu_custom_call.1} parent=51 // pred_fallthru
          _
      $region52: #{tpu_custom_call.1} parent=5 // pred_fallthru
        _
      %p597 = scmp.le.s32.totalorder 2, %s20
      // Predicated region
      $region61: #{tpu_custom_call.1} parent=5 // pred_check
        %p598 = pneg %p597
      $region62: #{tpu_custom_call.1} parent=5 // pred_check_branch
        %600 = sbr.rel (%p598) target = $region64
      $region63: #{tpu_custom_call.1} parent=5 // pred_region
        %s601 = ssub.s32 %s20, 2
        // Predicated region
        $region65: #{tpu_custom_call.1} parent=63 // pred_check
          %p602 = pneg %p222
        $region66: #{tpu_custom_call.1} parent=63 // pred_check_branch
          %604 = sbr.rel (%p602) target = $region68
        $region67: #{tpu_custom_call.1} parent=63 // pred_region
          %s605 = sand.u32 %s207, 1
          %s606 = scalar_lea.sflag [#allocation4], %s605
          %s607 = sand.u32 %s207, 1
          %s608 = smul.addr %s607, 32
          %s609 = scalar_lea.vmem [#allocation5], %s608
          %611 = dma.done %s606, 512
        $region68: #{tpu_custom_call.1} parent=63 // pred_fallthru
          _
      $region64: #{tpu_custom_call.1} parent=5 // pred_fallthru
        _
    $region6: #{tpu_custom_call.1} parent=1 // loop_footer
      %s24 = sadd.s32 1, %s20
    $region7: #{tpu_custom_call.1} parent=1 // loop_footer_branch
      %19 = sbr.rel target = $region3
    $region8: #{tpu_custom_call.1} parent=1 // loop_exit
      _
    %612 = vsyncpa [#allocation3], 1
    %s613 = scalar_lea.sflag [#allocation3], 1
    %614 = vsyncpa %s613, 1
    %615 = vsyncpa [#allocation4], 1
    %s616 = scalar_lea.sflag [#allocation4], 1
    %617 = vsyncpa %s616, 1

</llo_original>
